<compile_context>
chip_gen: v7x
topology: tpu7x:2x2x1
jax: 0.10.0
libtpu: 0.0.40
codegen_flags: <defaults>
</compile_context>

<pallas_src>
import jax
import jax.numpy as jnp
from jax.experimental import pallas as pl
from jax.experimental.pallas import tpu as pltpu

_LANES = 128                        # vreg lane width
_MAX_BLOCK_BYTES = 2 * 1024 * 1024  # per operand per pipeline buffer
_MIN_PALLAS_ELEMENTS = 64 * 1024    # below this, plain jnp wins
_TARGET_GRID_STEPS = 4              # keep both v7x TensorCores streaming


def _cdiv(a, b):
    return -(-a // b)


def _round_up(a, b):
    return _cdiv(a, b) * b


def _shift_kernel(s_ref, x_ref, xp_ref, o_ref):
    # s_ref: (2,) f32 scalar-prefetch array in SMEM: [mu, 1 - mu].
    # x_ref / xp_ref / o_ref: (row_tile, 128) VMEM tiles.
    if x_ref.dtype == jnp.bfloat16:
        mu = s_ref[0].astype(jnp.bfloat16)
        omm = s_ref[1].astype(jnp.bfloat16)
        o_ref[...] = mu * x_ref[...] + omm * xp_ref[...]
    else:
        mu = s_ref[0]
        omm = s_ref[1]
        x = x_ref[...].astype(jnp.float32)
        xp = xp_ref[...].astype(jnp.float32)
        o_ref[...] = (mu * x + omm * xp).astype(o_ref.dtype)


def shift(x, x_prev, mu, *, min_pallas_elements=_MIN_PALLAS_ELEMENTS):
    """Pallas implementation of Shift.forward: mu * x + (1 - mu) * x_prev."""
    if x_prev is None:
        return x
    assert x.shape == x_prev.shape, "x and x_prev must have the same shape"

    orig_shape = x.shape
    dtype = x.dtype
    mu_f = jnp.asarray(mu, jnp.float32).reshape(())
    n = int(x.size)

    # Tiny-input bypass.
    if n < min_pallas_elements:
        out = mu_f * x.astype(jnp.float32) + (1.0 - mu_f) * x_prev.astype(jnp.float32)
        return out.astype(dtype)

    itemsize = jnp.dtype(dtype).itemsize
    sublane_gran = max(8, 32 // itemsize)           # 8 f32 / 16 bf16 / 32 int8
    max_row_tile = max(sublane_gran, _MAX_BLOCK_BYTES // (_LANES * itemsize))

    rows = _cdiv(n, _LANES)                         # lane-dense (rows, 128) view
    if rows <= sublane_gran:
        row_tile = rows                             # single full-array block
    else:
        row_tile = _round_up(_cdiv(rows, _TARGET_GRID_STEPS), sublane_gran)
        row_tile = max(sublane_gran, min(row_tile, max_row_tile))
    num_steps = _cdiv(rows, row_tile)

    # Repack to lane-dense 2D. Only the ragged tail (< 128 elements) is padded.
    pad_tail = rows * _LANES - n

    def _pack(a):
        flat = a.reshape(-1)
        if pad_tail:
            flat = jnp.pad(flat, (0, pad_tail))
        return flat.reshape(rows, _LANES)

    x2 = _pack(x)
    xp2 = _pack(x_prev)
    scalars = jnp.stack([mu_f, 1.0 - mu_f])         # (2,) f32 -> scalar prefetch

    cost = pl.CostEstimate(
        flops=3 * rows * _LANES,                     # mul, mul, add per element
        transcendentals=0,
        bytes_accessed=3 * rows * _LANES * itemsize,
    )

    out2 = pl.pallas_call(
        _shift_kernel,
        out_shape=jax.ShapeDtypeStruct((rows, _LANES), dtype),
        grid_spec=pltpu.PrefetchScalarGridSpec(
            num_scalar_prefetch=1,
            grid=(num_steps,),
            in_specs=[
                pl.BlockSpec((row_tile, _LANES), lambda i, s: (i, 0)),  # x
                pl.BlockSpec((row_tile, _LANES), lambda i, s: (i, 0)),  # x_prev
            ],
            out_specs=pl.BlockSpec((row_tile, _LANES), lambda i, s: (i, 0)),
        ),
        compiler_params=pltpu.CompilerParams(
            dimension_semantics=("parallel",)),
        cost_estimate=cost,
    )(scalars, x2, xp2)

    if pad_tail:
        return out2.reshape(-1)[:n].reshape(orig_shape)
    return out2.reshape(orig_shape)


def _reference(x, x_prev, mu):
    if x_prev is None:
        return x
    muf = jnp.asarray(mu, jnp.float32)
    return muf * x + (1.0 - muf) * x_prev


if __name__ == "__main__":
    key = jax.random.PRNGKey(0)
    k1, k2, k3, k4, k5, k6 = jax.random.split(key, 6)
    mu = jnp.float32(0.5)   # nn.Parameter(torch.tensor(0.5))

    # 1) Module-implied small shape (hidden=32) -> tiny-input bypass path.
    B, S, D = 2, 8, 32
    xs = jax.random.normal(k1, (B, S, D), jnp.float32)
    xps = jax.random.normal(k2, (B, S, D), jnp.float32)
    out_s = jax.block_until_ready(shift(xs, xps, mu))
    assert out_s.shape == (B, S, D)
    assert jnp.allclose(out_s, _reference(xs, xps, mu), atol=1e-6, rtol=1e-6)

    # x_prev is None early-return path (matches torch early return).
    out_none = jax.block_until_ready(shift(xs, None, mu))
    assert jnp.allclose(out_none, xs)

    # 2) Shape large enough to exercise the Pallas kernel; n = 131072 is an
    #    exact multiple of 128 lanes -> zero-copy repack, 4 parallel steps.
    xl = jax.random.normal(k3, (2, 1024, 64), jnp.float32)
    xpl = jax.random.normal(k4, (2, 1024, 64), jnp.float32)
    out_l = jax.block_until_ready(shift(xl, xpl, mu))
    assert out_l.shape == xl.shape
    assert jnp.allclose(out_l, _reference(xl, xpl, mu), atol=1e-6, rtol=1e-6)

    # 3) Ragged size (n % 128 != 0) -> tail pad + masked partial last block.
    xr = jax.random.normal(k5, (2, 257, 130), jnp.float32)
    xpr = jax.random.normal(k6, (2, 257, 130), jnp.float32)
    out_r = jax.block_until_ready(shift(xr, xpr, mu))
    assert out_r.shape == xr.shape
    assert jnp.allclose(out_r, _reference(xr, xpr, mu), atol=1e-6, rtol=1e-6)

    print("KERNEL_OK")
</pallas_src>

<mosaic_0001>
module attributes {stable_mosaic.version = 11 : i64} {
  func.func @_shift_kernel(%arg0: i32, %arg1: memref<2xf32, #tpu.memory_space<smem>>, %arg2: memref<256x128xf32, #tpu.memory_space<vmem>>, %arg3: memref<256x128xf32, #tpu.memory_space<vmem>>, %arg4: memref<256x128xf32, #tpu.memory_space<vmem>>) attributes {dimension_semantics = [#tpu.dimension_semantics<parallel>], iteration_bounds = array<i64: 4>, scalar_prefetch = 1 : i64, scratch_operands = 0 : i64, tpu.core_type = #tpu.core_type<tc>, window_params = [{transform_indices = @transform_0, window_bounds = array<i64: 256, 128>}, {transform_indices = @transform_1, window_bounds = array<i64: 256, 128>}, {transform_indices = @transform_2, window_bounds = array<i64: 256, 128>}]} {
    %c0 = arith.constant 0 : index
    %0 = memref.load %arg1[%c0] : memref<2xf32, #tpu.memory_space<smem>>
    %c1 = arith.constant 1 : index
    %1 = memref.load %arg1[%c1] : memref<2xf32, #tpu.memory_space<smem>>
    %c0_0 = arith.constant 0 : index
    %c0_1 = arith.constant 0 : index
    %2 = vector.load %arg2[%c0_0, %c0_1] : memref<256x128xf32, #tpu.memory_space<vmem>>, vector<256x128xf32>
    %c0_2 = arith.constant 0 : index
    %c0_3 = arith.constant 0 : index
    %3 = vector.load %arg3[%c0_2, %c0_3] : memref<256x128xf32, #tpu.memory_space<vmem>>, vector<256x128xf32>
    %4 = vector.broadcast %0 : f32 to vector<256x128xf32>
    %5 = arith.mulf %4, %2 : vector<256x128xf32>
    %6 = vector.broadcast %1 : f32 to vector<256x128xf32>
    %7 = arith.mulf %6, %3 : vector<256x128xf32>
    %8 = arith.addf %5, %7 : vector<256x128xf32>
    %c0_4 = arith.constant 0 : index
    %c0_5 = arith.constant 0 : index
    %9 = vector.load %arg4[%c0_4, %c0_5] : memref<256x128xf32, #tpu.memory_space<vmem>>, vector<256x128xf32>
    tpu.vector_store %arg4[%c0_4, %c0_5], %8 {strides = array<i32>} : memref<256x128xf32, #tpu.memory_space<vmem>>, vector<256x128xf32>,
    return
  }
  func.func @transform_0(%arg0: i32, %arg1: memref<2xf32, #tpu.memory_space<smem>>) -> (i32, i32) {
    %c0_i32 = arith.constant 0 : i32
    %c0_i32_0 = arith.constant 0 : i32
    return %arg0, %c0_i32 : i32, i32
  }
  func.func @transform_1(%arg0: i32, %arg1: memref<2xf32, #tpu.memory_space<smem>>) -> (i32, i32) {
    %c0_i32 = arith.constant 0 : i32
    %c0_i32_0 = arith.constant 0 : i32
    return %arg0, %c0_i32 : i32, i32
  }
  func.func @transform_2(%arg0: i32, %arg1: memref<2xf32, #tpu.memory_space<smem>>) -> (i32, i32) {
    %c0_i32 = arith.constant 0 : i32
    %c0_i32_0 = arith.constant 0 : i32
    return %arg0, %c0_i32 : i32, i32
  }
}

</mosaic_0001>

<llo_original>
// kernel: tpu_custom_call.1
$region0: #{tpu_custom_call.1}
  #allocation0 [shape = 'u32[]', space=smem, size = 0x4, offset = 0x4, fixed_abs, tag = 'smem constant byte address 0x4 - core index']
  #allocation1 [shape = 'u32[144,128]{1,0:T(1,128)}', space=vmem, size = 0x12000, scoped, tag = 'internal scratch']
  #allocation2 [shape = 's32[1]{0}', space=sflag, size = 0x4, scoped, tag = 'scoped memory for tpu_custom_call.1']
  #allocation3 [shape = 'u8[512]{0}', space=smem, size = 0x200, scoped, tag = 'prefetched SMEM operand 0']
  %s0 = inlined_call_operand.hbm [shape: f32[2], index: 0, kind: input, shape index: {}]
  %s1 = inlined_call_operand.hbm [shape: f32[1024,128], index: 1, kind: input, shape index: {}]
  %s2 = inlined_call_operand.hbm [shape: f32[1024,128], index: 2, kind: input, shape index: {}]
  %s3 = inlined_call_operand.hbm [shape: f32[1024,128], index: 3, kind: output, shape index: {}]
  %s4 = sld [smem:[#allocation0]]
  $region49: #{tpu_custom_call.1} parent=0
    _
  %s6 = ssub.s32 1, %s4
  %s7 = scalar_select 0, %s6, %s4
  %9 = dma.hbm_to_smem %s0, 16, [#allocation3], [#allocation2]
  %10 = dma.done [#allocation2], 16
  %11 = sfence
  $region1: #{tpu_custom_call.1} parent=0
    #allocation4 [shape = 'u8[262144]{0}', space=vmem, size = 0x40000, scoped, tag = 'input window, operand 1']
    #allocation5 [shape = 's32[2]{0}', space=sflag, size = 0x8, scoped, tag = 'scoped memory for tpu_custom_call.1']
    #allocation6 [shape = 's32[2]{0}', space=sflag, size = 0x8, scoped, tag = 'scoped memory for tpu_custom_call.1']
    #allocation7 [shape = 'u8[262144]{0}', space=vmem, size = 0x40000, scoped, tag = 'input window, operand 2']
    #allocation8 [shape = 's32[2]{0}', space=sflag, size = 0x8, scoped, tag = 'scoped memory for tpu_custom_call.1']
    #allocation9 [shape = 'u8[262144]{0}', space=vmem, size = 0x40000, scoped, tag = 'output window, operand 0']
    %12 = vsyncpa [#allocation5], 0
    %s13 = scalar_lea.sflag [#allocation5], 1
    %14 = vsyncpa %s13, 0
    %15 = vsyncpa [#allocation8], 0
    %s16 = scalar_lea.sflag [#allocation8], 1
    %17 = vsyncpa %s16, 0
    %18 = vsyncpa [#allocation6], 0
    %s19 = scalar_lea.sflag [#allocation6], 1
    %20 = vsyncpa %s19, 0
    loop: start=0, step=1, limit=6
    $region2: #{tpu_custom_call.1} parent=1 // loop_pre_header
      _
    $region3: #{tpu_custom_call.1} parent=1 // loop_header
      %s22 = sphi 0, %s26
      %p23 = scmp.ge.s32.totalorder %s22, 6
      %s32 = sphi 0, %s34
      %s35 = sphi 0, %s32
      %s36 = sphi 0, %s35
      %s52 = sphi 0, %s36
      %s58 = sphi 0, %s60
      %s61 = sphi 0, %s58
      %s62 = sphi 0, %s61
      %s78 = sphi 0, %s62
      %s84 = sphi 0, %s86
      %s87 = sphi 0, %s84
      %s88 = sphi 0, %s87
      %s104 = sphi 0, %s88
    $region4: #{tpu_custom_call.1} parent=1 // loop_header_branch
      %25 = sbr.rel (%p23) target = $region8
    $region5: #{tpu_custom_call.1} parent=1 // loop_body
      %s27 = ssub.s32 %s22, 1
      %s28 = ssub.s32 %s22, 2
      %s29 = sadd.s32 %s22, 1
      %s30 = ssub.s32 %s22, %s29
      %p31 = scmp.eq.s32.totalorder %s30, 0
      %s33 = sadd.s32 %s32, 1
      %s34 = scalar_select %p31, %s32, %s33
      %p37 = pneg %p31
      %p38 = scmp.eq.s32.totalorder %s22, 3
      %p39 = por %p37, %p38
      %p40 = scmp.ne.s32.totalorder %s32, %s35
      %p41 = scmp.eq.s32.totalorder %s22, 0
      %p42 = por %p40, %p41
      %p43 = scmp.ne.s32.totalorder %s32, %s35
      %p44 = scmp.eq.s32.totalorder %s27, 3
      %p45 = por %p43, %p44
      %p46 = scmp.ne.s32.totalorder %s35, %s36
      %p47 = scmp.eq.s32.totalorder %s27, 0
      %p48 = por %p46, %p47
      %p49 = scmp.ne.s32.totalorder %s35, %s36
      %p50 = scmp.eq.s32.totalorder %s28, 3
      %p51 = por %p49, %p50
      %p53 = scmp.ne.s32.totalorder %s36, %s52
      %p54 = scmp.eq.s32.totalorder %s28, 0
      %p55 = por %p53, %p54
      %s56 = ssub.s32 %s22, %s29
      %p57 = scmp.eq.s32.totalorder %s56, 0
      %s59 = sadd.s32 %s58, 1
      %s60 = scalar_select %p57, %s58, %s59
      %p63 = pneg %p57
      %p64 = scmp.eq.s32.totalorder %s22, 3
      %p65 = por %p63, %p64
      %p66 = scmp.ne.s32.totalorder %s58, %s61
      %p67 = scmp.eq.s32.totalorder %s22, 0
      %p68 = por %p66, %p67
      %p69 = scmp.ne.s32.totalorder %s58, %s61
      %p70 = scmp.eq.s32.totalorder %s27, 3
      %p71 = por %p69, %p70
      %p72 = scmp.ne.s32.totalorder %s61, %s62
      %p73 = scmp.eq.s32.totalorder %s27, 0
      %p74 = por %p72, %p73
      %p75 = scmp.ne.s32.totalorder %s61, %s62
      %p76 = scmp.eq.s32.totalorder %s28, 3
      %p77 = por %p75, %p76
      %p79 = scmp.ne.s32.totalorder %s62, %s78
      %p80 = scmp.eq.s32.totalorder %s28, 0
      %p81 = por %p79, %p80
      %s82 = ssub.s32 %s22, %s29
      %p83 = scmp.eq.s32.totalorder %s82, 0
      %s85 = sadd.s32 %s84, 1
      %s86 = scalar_select %p83, %s84, %s85
      %p89 = pneg %p83
      %p90 = scmp.eq.s32.totalorder %s22, 3
      %p91 = por %p89, %p90
      %p92 = scmp.ne.s32.totalorder %s84, %s87
      %p93 = scmp.eq.s32.totalorder %s22, 0
      %p94 = por %p92, %p93
      %p95 = scmp.ne.s32.totalorder %s84, %s87
      %p96 = scmp.eq.s32.totalorder %s27, 3
      %p97 = por %p95, %p96
      %p98 = scmp.ne.s32.totalorder %s87, %s88
      %p99 = scmp.eq.s32.totalorder %s27, 0
      %p100 = por %p98, %p99
      %p101 = scmp.ne.s32.totalorder %s87, %s88
      %p102 = scmp.eq.s32.totalorder %s28, 3
      %p103 = por %p101, %p102
      %p105 = scmp.ne.s32.totalorder %s88, %s104
      %p106 = scmp.eq.s32.totalorder %s28, 0
      %p107 = por %p105, %p106
      %p108 = scmp.le.s32.totalorder 1, %s22
      %p109 = scmp.lt.s32.totalorder %s22, 5
      %p110 = pnand %p108, %p109
      %p111 = pneg %p110
      // Predicated region
      $region9: #{tpu_custom_call.1} parent=5 // pred_check
        _
      $region10: #{tpu_custom_call.1} parent=5 // pred_check_branch
        %113 = sbr.rel (%p110) target = $region12
      $region11: #{tpu_custom_call.1} parent=5 // pred_region
        %s114 = ssub.s32 %s22, 1
      $region12: #{tpu_custom_call.1} parent=5 // pred_fallthru
        _
      %p115 = scmp.lt.s32.totalorder %s22, 4
      // Predicated region
      $region13: #{tpu_custom_call.1} parent=5 // pred_check
        %p116 = pneg %p115
      $region14: #{tpu_custom_call.1} parent=5 // pred_check_branch
        %118 = sbr.rel (%p116) target = $region16
      $region15: #{tpu_custom_call.1} parent=5 // pred_region
        // Predicated region
        $region17: #{tpu_custom_call.1} parent=15 // pred_check
          %p119 = pneg %p42
        $region18: #{tpu_custom_call.1} parent=15 // pred_check_branch
          %121 = sbr.rel (%p119) target = $region20
        $region19: #{tpu_custom_call.1} parent=15 // pred_region
          %s122 = sand.u32 %s32, 1
          %s123 = scalar_lea.sflag [#allocation5], %s122
          %s124 = sand.u32 %s32, 1
          %s125 = smul.addr %s124, 256
          %s126 = scalar_lea.vmem [#allocation4], %s125
          %s127 = smul.u32 32, %s22
          %s129 = ssub.s32 4096, 4096
          %130 = vsyncadd %s123, %s129
          %s131 = smul.addr %s127, 128
          %s132 = scalar_lea.hbm %s1, %s131
          %s133 = sshll.u32 %s126, 4
          %s134 = int_to_ptr.vmem [resolvable:$true] %s133
          %139 = dma.hbm_to_vmem [thread:$0]  %s132, 4096, %s134, %s123, 128, 128, 8
        $region20: #{tpu_custom_call.1} parent=15 // pred_fallthru
          _
        // Predicated region
        $region21: #{tpu_custom_call.1} parent=15 // pred_check
          %p140 = pneg %p68
        $region22: #{tpu_custom_call.1} parent=15 // pred_check_branch
          %142 = sbr.rel (%p140) target = $region24
        $region23: #{tpu_custom_call.1} parent=15 // pred_region
          %s143 = sand.u32 %s58, 1
          %s144 = scalar_lea.sflag [#allocation8], %s143
          %s145 = sand.u32 %s58, 1
          %s146 = smul.addr %s145, 256
          %s147 = scalar_lea.vmem [#allocation7], %s146
          %s148 = smul.u32 32, %s22
          %s150 = ssub.s32 4096, 4096
          %151 = vsyncadd %s144, %s150
          %s152 = smul.addr %s148, 128
          %s153 = scalar_lea.hbm %s2, %s152
          %s154 = sshll.u32 %s147, 4
          %s155 = int_to_ptr.vmem [resolvable:$true] %s154
          %160 = dma.hbm_to_vmem [thread:$0]  %s153, 4096, %s155, %s144, 128, 128, 8
        $region24: #{tpu_custom_call.1} parent=15 // pred_fallthru
          _
      $region16: #{tpu_custom_call.1} parent=5 // pred_fallthru
        _
      %p161 = scmp.le.s32.totalorder 1, %s22
      %p162 = scmp.lt.s32.totalorder %s22, 5
      %p163 = pnand %p161, %p162
      %p164 = pneg %p163
      // Predicated region
      $region25: #{tpu_custom_call.1} parent=5 // pred_check
        _
      $region26: #{tpu_custom_call.1} parent=5 // pred_check_branch
        %166 = sbr.rel (%p163) target = $region28
      $region27: #{tpu_custom_call.1} parent=5 // pred_region
        %s167 = ssub.s32 %s22, 1
        %s168 = sand.u32 %s35, 1
        %s169 = scalar_lea.sflag [#allocation5], %s168
        %s170 = sand.u32 %s35, 1
        %s171 = smul.addr %s170, 256
        %s172 = scalar_lea.vmem [#allocation4], %s171
        // Predicated region
        $region29: #{tpu_custom_call.1} parent=27 // pred_check
          %p173 = pneg %p48
        $region30: #{tpu_custom_call.1} parent=27 // pred_check_branch
          %175 = sbr.rel (%p173) target = $region32
        $region31: #{tpu_custom_call.1} parent=27 // pred_region
          %176 = dma.done %s169, 4096
        $region32: #{tpu_custom_call.1} parent=27 // pred_fallthru
          _
        %s177 = sand.u32 %s61, 1
        %s178 = scalar_lea.sflag [#allocation8], %s177
        %s179 = sand.u32 %s61, 1
        %s180 = smul.addr %s179, 256
        %s181 = scalar_lea.vmem [#allocation7], %s180
        // Predicated region
        $region33: #{tpu_custom_call.1} parent=27 // pred_check
          %p182 = pneg %p74
        $region34: #{tpu_custom_call.1} parent=27 // pred_check_branch
          %184 = sbr.rel (%p182) target = $region36
        $region35: #{tpu_custom_call.1} parent=27 // pred_region
          %185 = dma.done %s178, 4096
        $region36: #{tpu_custom_call.1} parent=27 // pred_fallthru
          _
        %s186 = sand.u32 %s35, 1
        %s187 = scalar_lea.sflag [#allocation5], %s186
        %s188 = sand.u32 %s35, 1
        %s189 = smul.addr %s188, 256
        %s190 = scalar_lea.vmem [#allocation4], %s189
        %p191 = pneg %p48
        %p192 = pneg %p45
        %s193 = sand.u32 %s61, 1
        %s194 = scalar_lea.sflag [#allocation8], %s193
        %s195 = sand.u32 %s61, 1
        %s196 = smul.addr %s195, 256
        %s197 = scalar_lea.vmem [#allocation7], %s196
        %p198 = pneg %p74
        %p199 = pneg %p71
        %p200 = pneg %p100
        %p201 = pneg %p97
        %s202 = sand.u32 %s87, 1
        %s203 = scalar_lea.sflag [#allocation6], %s202
        %s204 = sand.u32 %s87, 1
        %s205 = smul.addr %s204, 256
        %s206 = scalar_lea.vmem [#allocation9], %s205
        %s207 = smul.u32 32, %s27
        %s208 = smul.u32 32, %s27
        %s209 = smul.u32 32, %s27
        %s210 = sld [smem:[#allocation3]]
        %s211 = sld [smem:[#allocation3 + $0x1]]
        %v212 = vld [vmem:[%s172] sm:$0xff]
        %v213 = vld [vmem:[%s172 + $0x8] sm:$0xff]
        %v214 = vld [vmem:[%s172 + $0x10] sm:$0xff]
        %v215 = vld [vmem:[%s172 + $0x18] sm:$0xff]
        %v216 = vld [vmem:[%s172 + $0x20] sm:$0xff]
        %v217 = vld [vmem:[%s172 + $0x28] sm:$0xff]
        %v218 = vld [vmem:[%s172 + $0x30] sm:$0xff]
        %v219 = vld [vmem:[%s172 + $0x38] sm:$0xff]
        %v220 = vld [vmem:[%s172 + $0x40] sm:$0xff]
        %v221 = vld [vmem:[%s172 + $0x48] sm:$0xff]
        %v222 = vld [vmem:[%s172 + $0x50] sm:$0xff]
        %v223 = vld [vmem:[%s172 + $0x58] sm:$0xff]
        %v224 = vld [vmem:[%s172 + $0x60] sm:$0xff]
        %v225 = vld [vmem:[%s172 + $0x68] sm:$0xff]
        %v226 = vld [vmem:[%s172 + $0x70] sm:$0xff]
        %v227 = vld [vmem:[%s172 + $0x78] sm:$0xff]
        %v228 = vld [vmem:[%s172 + $0x80] sm:$0xff]
        %v229 = vld [vmem:[%s172 + $0x88] sm:$0xff]
        %v230 = vld [vmem:[%s172 + $0x90] sm:$0xff]
        %v231 = vld [vmem:[%s172 + $0x98] sm:$0xff]
        %v232 = vld [vmem:[%s172 + $0xa0] sm:$0xff]
        %v233 = vld [vmem:[%s172 + $0xa8] sm:$0xff]
        %v234 = vld [vmem:[%s172 + $0xb0] sm:$0xff]
        %v235 = vld [vmem:[%s172 + $0xb8] sm:$0xff]
        %v236 = vld [vmem:[%s172 + $0xc0] sm:$0xff]
        %v237 = vld [vmem:[%s172 + $0xc8] sm:$0xff]
        %v238 = vld [vmem:[%s172 + $0xd0] sm:$0xff]
        %v239 = vld [vmem:[%s172 + $0xd8] sm:$0xff]
        %v240 = vld [vmem:[%s172 + $0xe0] sm:$0xff]
        %v241 = vld [vmem:[%s172 + $0xe8] sm:$0xff]
        %v242 = vld [vmem:[%s172 + $0xf0] sm:$0xff]
        %v243 = vld [vmem:[%s172 + $0xf8] sm:$0xff]
        %v244 = vld [vmem:[%s181] sm:$0xff]
        %v245 = vld [vmem:[%s181 + $0x8] sm:$0xff]
        %v246 = vld [vmem:[%s181 + $0x10] sm:$0xff]
        %v247 = vld [vmem:[%s181 + $0x18] sm:$0xff]
        %v248 = vld [vmem:[%s181 + $0x20] sm:$0xff]
        %v249 = vld [vmem:[%s181 + $0x28] sm:$0xff]
        %v250 = vld [vmem:[%s181 + $0x30] sm:$0xff]
        %v251 = vld [vmem:[%s181 + $0x38] sm:$0xff]
        %v252 = vld [vmem:[%s181 + $0x40] sm:$0xff]
        %v253 = vld [vmem:[%s181 + $0x48] sm:$0xff]
        %v254 = vld [vmem:[%s181 + $0x50] sm:$0xff]
        %v255 = vld [vmem:[%s181 + $0x58] sm:$0xff]
        %v256 = vld [vmem:[%s181 + $0x60] sm:$0xff]
        %v257 = vld [vmem:[%s181 + $0x68] sm:$0xff]
        %v258 = vld [vmem:[%s181 + $0x70] sm:$0xff]
        %v259 = vld [vmem:[%s181 + $0x78] sm:$0xff]
        %v260 = vld [vmem:[%s181 + $0x80] sm:$0xff]
        %v261 = vld [vmem:[%s181 + $0x88] sm:$0xff]
        %v262 = vld [vmem:[%s181 + $0x90] sm:$0xff]
        %v263 = vld [vmem:[%s181 + $0x98] sm:$0xff]
        %v264 = vld [vmem:[%s181 + $0xa0] sm:$0xff]
        %v265 = vld [vmem:[%s181 + $0xa8] sm:$0xff]
        %v266 = vld [vmem:[%s181 + $0xb0] sm:$0xff]
        %v267 = vld [vmem:[%s181 + $0xb8] sm:$0xff]
        %v268 = vld [vmem:[%s181 + $0xc0] sm:$0xff]
        %v269 = vld [vmem:[%s181 + $0xc8] sm:$0xff]
        %v270 = vld [vmem:[%s181 + $0xd0] sm:$0xff]
        %v271 = vld [vmem:[%s181 + $0xd8] sm:$0xff]
        %v272 = vld [vmem:[%s181 + $0xe0] sm:$0xff]
        %v273 = vld [vmem:[%s181 + $0xe8] sm:$0xff]
        %v274 = vld [vmem:[%s181 + $0xf0] sm:$0xff]
        %v275 = vld [vmem:[%s181 + $0xf8] sm:$0xff]
        %v276 = vstv %s210
        %v277 = vmul.f32 %v276, %v212
        %v278 = vmul.f32 %v276, %v213
        %v279 = vmul.f32 %v276, %v214
        %v280 = vmul.f32 %v276, %v215
        %v281 = vmul.f32 %v276, %v216
        %v282 = vmul.f32 %v276, %v217
        %v283 = vmul.f32 %v276, %v218
        %v284 = vmul.f32 %v276, %v219
        %v285 = vmul.f32 %v276, %v220
        %v286 = vmul.f32 %v276, %v221
        %v287 = vmul.f32 %v276, %v222
        %v288 = vmul.f32 %v276, %v223
        %v289 = vmul.f32 %v276, %v224
        %v290 = vmul.f32 %v276, %v225
        %v291 = vmul.f32 %v276, %v226
        %v292 = vmul.f32 %v276, %v227
        %v293 = vmul.f32 %v276, %v228
        %v294 = vmul.f32 %v276, %v229
        %v295 = vmul.f32 %v276, %v230
        %v296 = vmul.f32 %v276, %v231
        %v297 = vmul.f32 %v276, %v232
        %v298 = vmul.f32 %v276, %v233
        %v299 = vmul.f32 %v276, %v234
        %v300 = vmul.f32 %v276, %v235
        %v301 = vmul.f32 %v276, %v236
        %v302 = vmul.f32 %v276, %v237
        %v303 = vmul.f32 %v276, %v238
        %v304 = vmul.f32 %v276, %v239
        %v305 = vmul.f32 %v276, %v240
        %v306 = vmul.f32 %v276, %v241
        %v307 = vmul.f32 %v276, %v242
        %v308 = vmul.f32 %v276, %v243
        %v309 = vstv %s211
        %v310 = vmul.f32 %v309, %v244
        %v311 = vmul.f32 %v309, %v245
        %v312 = vmul.f32 %v309, %v246
        %v313 = vmul.f32 %v309, %v247
        %v314 = vmul.f32 %v309, %v248
        %v315 = vmul.f32 %v309, %v249
        %v316 = vmul.f32 %v309, %v250
        %v317 = vmul.f32 %v309, %v251
        %v318 = vmul.f32 %v309, %v252
        %v319 = vmul.f32 %v309, %v253
        %v320 = vmul.f32 %v309, %v254
        %v321 = vmul.f32 %v309, %v255
        %v322 = vmul.f32 %v309, %v256
        %v323 = vmul.f32 %v309, %v257
        %v324 = vmul.f32 %v309, %v258
        %v325 = vmul.f32 %v309, %v259
        %v326 = vmul.f32 %v309, %v260
        %v327 = vmul.f32 %v309, %v261
        %v328 = vmul.f32 %v309, %v262
        %v329 = vmul.f32 %v309, %v263
        %v330 = vmul.f32 %v309, %v264
        %v331 = vmul.f32 %v309, %v265
        %v332 = vmul.f32 %v309, %v266
        %v333 = vmul.f32 %v309, %v267
        %v334 = vmul.f32 %v309, %v268
        %v335 = vmul.f32 %v309, %v269
        %v336 = vmul.f32 %v309, %v270
        %v337 = vmul.f32 %v309, %v271
        %v338 = vmul.f32 %v309, %v272
        %v339 = vmul.f32 %v309, %v273
        %v340 = vmul.f32 %v309, %v274
        %v341 = vmul.f32 %v309, %v275
        %v342 = vadd.f32 %v277, %v310
        %v343 = vadd.f32 %v278, %v311
        %v344 = vadd.f32 %v279, %v312
        %v345 = vadd.f32 %v280, %v313
        %v346 = vadd.f32 %v281, %v314
        %v347 = vadd.f32 %v282, %v315
        %v348 = vadd.f32 %v283, %v316
        %v349 = vadd.f32 %v284, %v317
        %v350 = vadd.f32 %v285, %v318
        %v351 = vadd.f32 %v286, %v319
        %v352 = vadd.f32 %v287, %v320
        %v353 = vadd.f32 %v288, %v321
        %v354 = vadd.f32 %v289, %v322
        %v355 = vadd.f32 %v290, %v323
        %v356 = vadd.f32 %v291, %v324
        %v357 = vadd.f32 %v292, %v325
        %v358 = vadd.f32 %v293, %v326
        %v359 = vadd.f32 %v294, %v327
        %v360 = vadd.f32 %v295, %v328
        %v361 = vadd.f32 %v296, %v329
        %v362 = vadd.f32 %v297, %v330
        %v363 = vadd.f32 %v298, %v331
        %v364 = vadd.f32 %v299, %v332
        %v365 = vadd.f32 %v300, %v333
        %v366 = vadd.f32 %v301, %v334
        %v367 = vadd.f32 %v302, %v335
        %v368 = vadd.f32 %v303, %v336
        %v369 = vadd.f32 %v304, %v337
        %v370 = vadd.f32 %v305, %v338
        %v371 = vadd.f32 %v306, %v339
        %v372 = vadd.f32 %v307, %v340
        %v373 = vadd.f32 %v308, %v341
        %374 = vst [vmem:[%s206] sm:$0xff] %v342
        %375 = vst [vmem:[%s206 + $0x8] sm:$0xff] %v343
        %376 = vst [vmem:[%s206 + $0x10] sm:$0xff] %v344
        %377 = vst [vmem:[%s206 + $0x18] sm:$0xff] %v345
        %378 = vst [vmem:[%s206 + $0x20] sm:$0xff] %v346
        %379 = vst [vmem:[%s206 + $0x28] sm:$0xff] %v347
        %380 = vst [vmem:[%s206 + $0x30] sm:$0xff] %v348
        %381 = vst [vmem:[%s206 + $0x38] sm:$0xff] %v349
        %382 = vst [vmem:[%s206 + $0x40] sm:$0xff] %v350
        %383 = vst [vmem:[%s206 + $0x48] sm:$0xff] %v351
        %384 = vst [vmem:[%s206 + $0x50] sm:$0xff] %v352
        %385 = vst [vmem:[%s206 + $0x58] sm:$0xff] %v353
        %386 = vst [vmem:[%s206 + $0x60] sm:$0xff] %v354
        %387 = vst [vmem:[%s206 + $0x68] sm:$0xff] %v355
        %388 = vst [vmem:[%s206 + $0x70] sm:$0xff] %v356
        %389 = vst [vmem:[%s206 + $0x78] sm:$0xff] %v357
        %390 = vst [vmem:[%s206 + $0x80] sm:$0xff] %v358
        %391 = vst [vmem:[%s206 + $0x88] sm:$0xff] %v359
        %392 = vst [vmem:[%s206 + $0x90] sm:$0xff] %v360
        %393 = vst [vmem:[%s206 + $0x98] sm:$0xff] %v361
        %394 = vst [vmem:[%s206 + $0xa0] sm:$0xff] %v362
        %395 = vst [vmem:[%s206 + $0xa8] sm:$0xff] %v363
        %396 = vst [vmem:[%s206 + $0xb0] sm:$0xff] %v364
        %397 = vst [vmem:[%s206 + $0xb8] sm:$0xff] %v365
        %398 = vst [vmem:[%s206 + $0xc0] sm:$0xff] %v366
        %399 = vst [vmem:[%s206 + $0xc8] sm:$0xff] %v367
        %400 = vst [vmem:[%s206 + $0xd0] sm:$0xff] %v368
        %401 = vst [vmem:[%s206 + $0xd8] sm:$0xff] %v369
        %402 = vst [vmem:[%s206 + $0xe0] sm:$0xff] %v370
        %403 = vst [vmem:[%s206 + $0xe8] sm:$0xff] %v371
        %404 = vst [vmem:[%s206 + $0xf0] sm:$0xff] %v372
        %405 = vst [vmem:[%s206 + $0xf8] sm:$0xff] %v373
        %s406 = sand.u32 %s87, 1
        %s407 = scalar_lea.sflag [#allocation6], %s406
        %s408 = sand.u32 %s87, 1
        %s409 = smul.addr %s408, 256
        %s410 = scalar_lea.vmem [#allocation9], %s409
        // Predicated region
        $region37: #{tpu_custom_call.1} parent=27 // pred_check
          %p411 = pneg %p97
        $region38: #{tpu_custom_call.1} parent=27 // pred_check_branch
          %413 = sbr.rel (%p411) target = $region40
        $region39: #{tpu_custom_call.1} parent=27 // pred_region
          %s414 = smul.u32 32, %s27
          %s416 = ssub.s32 4096, 4096
          %417 = vsyncadd %s407, %s416
          %s418 = smul.addr %s414, 128
          %s419 = scalar_lea.hbm %s3, %s418
          %s420 = sshll.u32 %s410, 4
          %s421 = int_to_ptr.vmem [resolvable:$true] %s420
          %426 = dma.vmem_to_hbm [thread:$0]  %s421, 4096, %s419, %s407, 128, 128, 8
        $region40: #{tpu_custom_call.1} parent=27 // pred_fallthru
          _
      $region28: #{tpu_custom_call.1} parent=5 // pred_fallthru
        _
      %p427 = scmp.le.s32.totalorder 2, %s22
      // Predicated region
      $region41: #{tpu_custom_call.1} parent=5 // pred_check
        %p428 = pneg %p427
      $region42: #{tpu_custom_call.1} parent=5 // pred_check_branch
        %430 = sbr.rel (%p428) target = $region44
      $region43: #{tpu_custom_call.1} parent=5 // pred_region
        %s431 = ssub.s32 %s22, 2
        // Predicated region
        $region45: #{tpu_custom_call.1} parent=43 // pred_check
          %p432 = pneg %p103
        $region46: #{tpu_custom_call.1} parent=43 // pred_check_branch
          %434 = sbr.rel (%p432) target = $region48
        $region47: #{tpu_custom_call.1} parent=43 // pred_region
          %s435 = sand.u32 %s88, 1
          %s436 = scalar_lea.sflag [#allocation6], %s435
          %s437 = sand.u32 %s88, 1
          %s438 = smul.addr %s437, 256
          %s439 = scalar_lea.vmem [#allocation9], %s438
          %440 = dma.done %s436, 4096
        $region48: #{tpu_custom_call.1} parent=43 // pred_fallthru
          _
      $region44: #{tpu_custom_call.1} parent=5 // pred_fallthru
        _
    $region6: #{tpu_custom_call.1} parent=1 // loop_footer
      %s26 = sadd.s32 1, %s22
    $region7: #{tpu_custom_call.1} parent=1 // loop_footer_branch
      %21 = sbr.rel target = $region3
    $region8: #{tpu_custom_call.1} parent=1 // loop_exit
      _
    %441 = vsyncpa [#allocation5], 1
    %s442 = scalar_lea.sflag [#allocation5], 1
    %443 = vsyncpa %s442, 1
    %444 = vsyncpa [#allocation8], 1
    %s445 = scalar_lea.sflag [#allocation8], 1
    %446 = vsyncpa %s445, 1
    %447 = vsyncpa [#allocation6], 1
    %s448 = scalar_lea.sflag [#allocation6], 1
    %449 = vsyncpa %s448, 1

</llo_original>
